<compile_context>
chip_gen: v5e
topology: v5e:2x2
jax: 0.10.0
libtpu: 0.0.40
codegen_flags: <defaults>
</compile_context>

<pallas_src>
import jax
import jax.numpy as jnp
from jax.experimental import pallas as pl
from jax.experimental.pallas import tpu as pltpu


def _ntuple(v, n):
    if isinstance(v, (tuple, list)):
        assert len(v) == n, (v, n)
        return tuple(int(e) for e in v)
    return (int(v),) * n


def _round_up(a, b):
    return -(-a // b) * b


def _cdiv(a, b):
    return -(-a // b)


def _vmem_budgets():
    """(per-step block budget, compiler vmem limit) derived from the chip."""
    try:
        cap = int(pltpu.get_tpu_info().vmem_capacity_bytes)
    except Exception:  # not on TPU / API unavailable -> assume smallest (v7x, 64 MiB)
        cap = 64 * 1024 * 1024
    # block budget covers (input block + output block) * 2 pipeline buffers.
    return cap // 3, (3 * cap) // 4


def _make_copy_kernel(kh, kw, dh, dw, sh, sw, OH, OW, channels_last):
    """Bit-exact windowed copy. All indices are static Python ints."""

    def kernel(x_ref, o_ref):
        for i in range(kh):
            hr, p0 = (i * dh) % sh, (i * dh) // sh
            for j in range(kw):
                wr, q0 = (j * dw) % sw, (j * dw) // sw
                if channels_last:
                    # x_ref: (sh, sw, Hq, Wq, tn)   o_ref: (kh, kw, OH, OW, tn)
                    o_ref[i, j, :, :, :] = x_ref[hr, wr, p0:p0 + OH, q0:q0 + OW, :]
                else:
                    # x_ref: (tm, sh, sw, Hq, Wq)   o_ref: (tm, kh, kw, OH, OW)
                    o_ref[:, i, j, :, :] = x_ref[:, hr, wr, p0:p0 + OH, q0:q0 + OW]

    return kernel


def _unfold2d(x, kernel_size, dilation, padding, stride, layout=None):
    B, C, H, W = x.shape
    kh, kw = kernel_size
    dh, dw = dilation
    ph, pw = padding
    sh, sw = stride

    Hp, Wp = H + 2 * ph, W + 2 * pw
    OH = (Hp - dh * (kh - 1) - 1) // sh + 1
    OW = (Wp - dw * (kw - 1) - 1) // sw + 1
    assert OH > 0 and OW > 0, "kernel does not fit input"

    # Stride-phase decomposition: h = hq*sh + hr.  For kernel offset (i, j) the
    # selected pixels share phase ((i*dh)%sh, (j*dw)%sw) and form the contiguous
    # window [i*dh//sh, +OH) x [j*dw//sw, +OW) of that phase plane.
    Hq, Wq = _cdiv(Hp, sh), _cdiv(Wp, sw)
    H2, W2 = Hq * sh, Wq * sw
    BC = B * C

    if layout is None:
        # channels_last pays one input- and one output-sized transpose in XLA,
        # so only pick it when the lane/store-density win is large.
        layout = "channels_last" if min(BC, 128) >= 4 * min(OW, 128) else "bc_major"
    assert layout in ("bc_major", "channels_last"), layout

    itemsize = jnp.dtype(x.dtype).itemsize
    sub = max(8, 32 // itemsize)  # sublane tile: 8 f32, 16 bf16, 32 int8
    block_budget, vmem_limit = _vmem_budgets()

    # ---- wrapper glue: spatial pad (+ phase split) -------------------------
    xr = x.reshape(BC, H, W)
    pad = ((0, 0), (ph, H2 - H - ph), (pw, W2 - W - pw))
    xp = jnp.pad(xr, pad) if any(p != (0, 0) for p in pad) else xr

    kernel = _make_copy_kernel(kh, kw, dh, dw, sh, sw, OH, OW,
                               channels_last=(layout == "channels_last"))
    cparams = pltpu.CompilerParams(dimension_semantics=("parallel",),
                                   vmem_limit_bytes=vmem_limit)

    if layout == "bc_major":
        if sh == 1 and sw == 1:
            xt = xp.reshape(BC, 1, 1, H2, W2)            # pure reshape, no copy
        else:
            xt = xp.reshape(BC, Hq, sh, Wq, sw).transpose(0, 2, 4, 1, 3)

        # (sublane,128)-padded VMEM bytes per B*C row (input + output blocks).
        in_row = sh * sw * _round_up(Hq, sub) * _round_up(Wq, 128) * itemsize
        out_row = kh * kw * _round_up(OH, sub) * _round_up(OW, 128) * itemsize
        tm = max(1, min(BC, block_budget // (2 * (in_row + out_row))))
        if BC >= 2:
            tm = min(tm, _cdiv(BC, 2))   # >= 2 grid steps for v7x's 2 TensorCores
        n_m = _cdiv(BC, tm)

        out = pl.pallas_call(
            kernel,
            out_shape=jax.ShapeDtypeStruct((BC, kh, kw, OH, OW), x.dtype),
            grid_spec=pltpu.PrefetchScalarGridSpec(
                num_scalar_prefetch=0,
                grid=(n_m,),
                in_specs=[pl.BlockSpec((tm, sh, sw, Hq, Wq),
                                       lambda m: (m, 0, 0, 0, 0))],
                out_specs=pl.BlockSpec((tm, kh, kw, OH, OW),
                                       lambda m: (m, 0, 0, 0, 0)),
            ),
            compiler_params=cparams,
        )(xt)
        # Contiguous (free) reshape to torch layout [B, C*kh*kw, OH*OW].
        return out.reshape(B, C * kh * kw, OH * OW)

    # ---- channels_last: lane dim is a B*C tile -> full-width stores --------
    xt = xp.transpose(1, 2, 0).reshape(Hq, sh, Wq, sw, BC).transpose(1, 3, 0, 2, 4)

    in_grp = sh * sw * Hq * _round_up(Wq, sub) * 128 * itemsize
    out_grp = kh * kw * OH * _round_up(OW, sub) * 128 * itemsize
    if BC <= 128:
        tn = BC
    else:
        groups = max(1, block_budget // (2 * (in_grp + out_grp)))
        tn = min(groups * 128, _round_up(_cdiv(BC, 2), 128))   # >= 2 grid steps
        tn = max(128, min(tn, _round_up(BC, 128)))
    n_n = _cdiv(BC, tn)

    out = pl.pallas_call(
        kernel,
        out_shape=jax.ShapeDtypeStruct((kh, kw, OH, OW, BC), x.dtype),
        grid_spec=pltpu.PrefetchScalarGridSpec(
            num_scalar_prefetch=0,
            grid=(n_n,),
            in_specs=[pl.BlockSpec((sh, sw, Hq, Wq, tn),
                                   lambda n: (0, 0, 0, 0, n))],
            out_specs=pl.BlockSpec((kh, kw, OH, OW, tn),
                                   lambda n: (0, 0, 0, 0, n)),
        ),
        compiler_params=cparams,
    )(xt)
    # One output-sized transpose back to the torch layout.
    return jnp.transpose(out, (4, 0, 1, 2, 3)).reshape(B, C * kh * kw, OH * OW)


def unfold_nd(x, kernel_size, dilation=1, padding=0, stride=1, layout=None):
    """JAX/Pallas equivalent of unfoldNd (torch.nn.Unfold for 4-D inputs)."""
    if x.ndim == 4:
        return _unfold2d(x, _ntuple(kernel_size, 2), _ntuple(dilation, 2),
                         _ntuple(padding, 2), _ntuple(stride, 2), layout)
    if x.ndim == 3:
        (k,) = _ntuple(kernel_size, 1)
        (d,) = _ntuple(dilation, 1)
        (p,) = _ntuple(padding, 1)
        (s,) = _ntuple(stride, 1)
        return _unfold2d(x[:, :, None, :], (1, k), (1, d), (0, p), (1, s), layout)
    # TODO(synk): 5-D inputs (3 spatial dims) need a 3-axis phase split.
    raise NotImplementedError("only 3-D and 4-D inputs are supported")


def _unfold_reference(x, kernel_size, dilation=1, padding=0, stride=1):
    """Pure-JAX direct-gather reference matching torch.nn.Unfold semantics."""
    B, C, H, W = x.shape
    kh, kw = _ntuple(kernel_size, 2)
    dh, dw = _ntuple(dilation, 2)
    ph, pw = _ntuple(padding, 2)
    sh, sw = _ntuple(stride, 2)
    xp = jnp.pad(x, ((0, 0), (0, 0), (ph, ph), (pw, pw)))
    Hp, Wp = H + 2 * ph, W + 2 * pw
    OH = (Hp - dh * (kh - 1) - 1) // sh + 1
    OW = (Wp - dw * (kw - 1) - 1) // sw + 1
    cols = []
    for i in range(kh):
        for j in range(kw):
            patch = xp[:, :,
                       i * dh: i * dh + sh * (OH - 1) + 1: sh,
                       j * dw: j * dw + sw * (OW - 1) + 1: sw]
            cols.append(patch.reshape(B, C, 1, OH * OW))
    return jnp.concatenate(cols, axis=2).reshape(B, C * kh * kw, OH * OW)


if __name__ == "__main__":
    key = jax.random.PRNGKey(0)
    x = jax.random.normal(key, (2, 4, 16, 16), dtype=jnp.float32)

    configs = [
        dict(kernel_size=3, dilation=1, padding=1, stride=2),
        dict(kernel_size=(3, 2), dilation=2, padding=(2, 1), stride=(2, 3)),
        dict(kernel_size=2, dilation=1, padding=0, stride=1),
    ]
    for cfg in configs:
        ref = _unfold_reference(x, **cfg)
        for layout in ("bc_major", "channels_last"):
            out = jax.block_until_ready(unfold_nd(x, **cfg, layout=layout))
            assert out.shape == ref.shape, (layout, out.shape, ref.shape)
            # Pure copy kernel -> bit-exact match.
            assert bool(jnp.array_equal(out, ref)), f"mismatch {cfg} {layout}"

    # Auto layout heuristic path.
    out = jax.block_until_ready(unfold_nd(x, **configs[0]))
    assert bool(jnp.array_equal(out, _unfold_reference(x, **configs[0])))

    # 3-D input path (1-D unfold), validated against the lifted 4-D reference.
    x1 = jax.random.normal(jax.random.PRNGKey(1), (2, 3, 32), dtype=jnp.float32)
    ref1 = _unfold_reference(x1[:, :, None, :], kernel_size=(1, 3),
                             dilation=(1, 1), padding=(0, 1), stride=(1, 2))
    for layout in ("bc_major", "channels_last"):
        o1 = jax.block_until_ready(
            unfold_nd(x1, 3, dilation=1, padding=1, stride=2, layout=layout))
        assert o1.shape == ref1.shape and bool(jnp.array_equal(o1, ref1)), layout

    print("KERNEL_OK")
</pallas_src>

<mosaic_0001>
module attributes {stable_mosaic.version = 11 : i64} {
  func.func @kernel(%arg0: i32, %arg1: memref<4x2x2x9x9xf32, #tpu.memory_space<vmem>>, %arg2: memref<4x3x3x8x8xf32, #tpu.memory_space<vmem>>) attributes {dimension_semantics = [#tpu.dimension_semantics<parallel>], iteration_bounds = array<i64: 2>, scalar_prefetch = 0 : i64, scratch_operands = 0 : i64, tpu.core_type = #tpu.core_type<tc>, window_params = [{transform_indices = @transform_0, window_bounds = array<i64: 4, 2, 2, 9, 9>}, {transform_indices = @transform_1, window_bounds = array<i64: 4, 3, 3, 8, 8>}]} {
    %c0 = arith.constant 0 : index
    %c0_0 = arith.constant 0 : index
    %c0_1 = arith.constant 0 : index
    %c0_2 = arith.constant 0 : index
    %c0_3 = arith.constant 0 : index
    %0 = vector.load %arg1[%c0, %c0_0, %c0_1, %c0_2, %c0_3] : memref<4x2x2x9x9xf32, #tpu.memory_space<vmem>>, vector<4x1x1x8x8xf32>
    %1 = vector.shape_cast %0 : vector<4x1x1x8x8xf32> to vector<4x8x8xf32>
    %c0_4 = arith.constant 0 : index
    %c0_5 = arith.constant 0 : index
    %c0_6 = arith.constant 0 : index
    %c0_7 = arith.constant 0 : index
    %c0_8 = arith.constant 0 : index
    %2 = vector.load %arg2[%c0_4, %c0_5, %c0_6, %c0_7, %c0_8] : memref<4x3x3x8x8xf32, #tpu.memory_space<vmem>>, vector<4x1x1x8x8xf32>
    %3 = vector.shape_cast %2 : vector<4x1x1x8x8xf32> to vector<4x8x8xf32>
    %4 = vector.shape_cast %1 : vector<4x8x8xf32> to vector<4x1x1x8x8xf32>
    tpu.vector_store %arg2[%c0_4, %c0_5, %c0_6, %c0_7, %c0_8], %4 {strides = array<i32>} : memref<4x3x3x8x8xf32, #tpu.memory_space<vmem>>, vector<4x1x1x8x8xf32>,
    %c0_9 = arith.constant 0 : index
    %c0_10 = arith.constant 0 : index
    %c1 = arith.constant 1 : index
    %c0_11 = arith.constant 0 : index
    %c0_12 = arith.constant 0 : index
    %5 = vector.load %arg1[%c0_9, %c0_10, %c1, %c0_11, %c0_12] : memref<4x2x2x9x9xf32, #tpu.memory_space<vmem>>, vector<4x1x1x8x8xf32>
    %6 = vector.shape_cast %5 : vector<4x1x1x8x8xf32> to vector<4x8x8xf32>
    %c0_13 = arith.constant 0 : index
    %c0_14 = arith.constant 0 : index
    %c1_15 = arith.constant 1 : index
    %c0_16 = arith.constant 0 : index
    %c0_17 = arith.constant 0 : index
    %7 = vector.load %arg2[%c0_13, %c0_14, %c1_15, %c0_16, %c0_17] : memref<4x3x3x8x8xf32, #tpu.memory_space<vmem>>, vector<4x1x1x8x8xf32>
    %8 = vector.shape_cast %7 : vector<4x1x1x8x8xf32> to vector<4x8x8xf32>
    %9 = vector.shape_cast %6 : vector<4x8x8xf32> to vector<4x1x1x8x8xf32>
    tpu.vector_store %arg2[%c0_13, %c0_14, %c1_15, %c0_16, %c0_17], %9 {strides = array<i32>} : memref<4x3x3x8x8xf32, #tpu.memory_space<vmem>>, vector<4x1x1x8x8xf32>,
    %c0_18 = arith.constant 0 : index
    %c0_19 = arith.constant 0 : index
    %c0_20 = arith.constant 0 : index
    %c0_21 = arith.constant 0 : index
    %c1_22 = arith.constant 1 : index
    %10 = vector.load %arg1[%c0_18, %c0_19, %c0_20, %c0_21, %c1_22] : memref<4x2x2x9x9xf32, #tpu.memory_space<vmem>>, vector<4x1x1x8x8xf32>
    %11 = vector.shape_cast %10 : vector<4x1x1x8x8xf32> to vector<4x8x8xf32>
    %c0_23 = arith.constant 0 : index
    %c0_24 = arith.constant 0 : index
    %c2 = arith.constant 2 : index
    %c0_25 = arith.constant 0 : index
    %c0_26 = arith.constant 0 : index
    %12 = vector.load %arg2[%c0_23, %c0_24, %c2, %c0_25, %c0_26] : memref<4x3x3x8x8xf32, #tpu.memory_space<vmem>>, vector<4x1x1x8x8xf32>
    %13 = vector.shape_cast %12 : vector<4x1x1x8x8xf32> to vector<4x8x8xf32>
    %14 = vector.shape_cast %11 : vector<4x8x8xf32> to vector<4x1x1x8x8xf32>
    tpu.vector_store %arg2[%c0_23, %c0_24, %c2, %c0_25, %c0_26], %14 {strides = array<i32>} : memref<4x3x3x8x8xf32, #tpu.memory_space<vmem>>, vector<4x1x1x8x8xf32>,
    %c0_27 = arith.constant 0 : index
    %c1_28 = arith.constant 1 : index
    %c0_29 = arith.constant 0 : index
    %c0_30 = arith.constant 0 : index
    %c0_31 = arith.constant 0 : index
    %15 = vector.load %arg1[%c0_27, %c1_28, %c0_29, %c0_30, %c0_31] : memref<4x2x2x9x9xf32, #tpu.memory_space<vmem>>, vector<4x1x1x8x8xf32>
    %16 = vector.shape_cast %15 : vector<4x1x1x8x8xf32> to vector<4x8x8xf32>
    %c0_32 = arith.constant 0 : index
    %c1_33 = arith.constant 1 : index
    %c0_34 = arith.constant 0 : index
    %c0_35 = arith.constant 0 : index
    %c0_36 = arith.constant 0 : index
    %17 = vector.load %arg2[%c0_32, %c1_33, %c0_34, %c0_35, %c0_36] : memref<4x3x3x8x8xf32, #tpu.memory_space<vmem>>, vector<4x1x1x8x8xf32>
    %18 = vector.shape_cast %17 : vector<4x1x1x8x8xf32> to vector<4x8x8xf32>
    %19 = vector.shape_cast %16 : vector<4x8x8xf32> to vector<4x1x1x8x8xf32>
    tpu.vector_store %arg2[%c0_32, %c1_33, %c0_34, %c0_35, %c0_36], %19 {strides = array<i32>} : memref<4x3x3x8x8xf32, #tpu.memory_space<vmem>>, vector<4x1x1x8x8xf32>,
    %c0_37 = arith.constant 0 : index
    %c1_38 = arith.constant 1 : index
    %c1_39 = arith.constant 1 : index
    %c0_40 = arith.constant 0 : index
    %c0_41 = arith.constant 0 : index
    %20 = vector.load %arg1[%c0_37, %c1_38, %c1_39, %c0_40, %c0_41] : memref<4x2x2x9x9xf32, #tpu.memory_space<vmem>>, vector<4x1x1x8x8xf32>
    %21 = vector.shape_cast %20 : vector<4x1x1x8x8xf32> to vector<4x8x8xf32>
    %c0_42 = arith.constant 0 : index
    %c1_43 = arith.constant 1 : index
    %c1_44 = arith.constant 1 : index
    %c0_45 = arith.constant 0 : index
    %c0_46 = arith.constant 0 : index
    %22 = vector.load %arg2[%c0_42, %c1_43, %c1_44, %c0_45, %c0_46] : memref<4x3x3x8x8xf32, #tpu.memory_space<vmem>>, vector<4x1x1x8x8xf32>
    %23 = vector.shape_cast %22 : vector<4x1x1x8x8xf32> to vector<4x8x8xf32>
    %24 = vector.shape_cast %21 : vector<4x8x8xf32> to vector<4x1x1x8x8xf32>
    tpu.vector_store %arg2[%c0_42, %c1_43, %c1_44, %c0_45, %c0_46], %24 {strides = array<i32>} : memref<4x3x3x8x8xf32, #tpu.memory_space<vmem>>, vector<4x1x1x8x8xf32>,
    %c0_47 = arith.constant 0 : index
    %c1_48 = arith.constant 1 : index
    %c0_49 = arith.constant 0 : index
    %c0_50 = arith.constant 0 : index
    %c1_51 = arith.constant 1 : index
    %25 = vector.load %arg1[%c0_47, %c1_48, %c0_49, %c0_50, %c1_51] : memref<4x2x2x9x9xf32, #tpu.memory_space<vmem>>, vector<4x1x1x8x8xf32>
    %26 = vector.shape_cast %25 : vector<4x1x1x8x8xf32> to vector<4x8x8xf32>
    %c0_52 = arith.constant 0 : index
    %c1_53 = arith.constant 1 : index
    %c2_54 = arith.constant 2 : index
    %c0_55 = arith.constant 0 : index
    %c0_56 = arith.constant 0 : index
    %27 = vector.load %arg2[%c0_52, %c1_53, %c2_54, %c0_55, %c0_56] : memref<4x3x3x8x8xf32, #tpu.memory_space<vmem>>, vector<4x1x1x8x8xf32>
    %28 = vector.shape_cast %27 : vector<4x1x1x8x8xf32> to vector<4x8x8xf32>
    %29 = vector.shape_cast %26 : vector<4x8x8xf32> to vector<4x1x1x8x8xf32>
    tpu.vector_store %arg2[%c0_52, %c1_53, %c2_54, %c0_55, %c0_56], %29 {strides = array<i32>} : memref<4x3x3x8x8xf32, #tpu.memory_space<vmem>>, vector<4x1x1x8x8xf32>,
    %c0_57 = arith.constant 0 : index
    %c0_58 = arith.constant 0 : index
    %c0_59 = arith.constant 0 : index
    %c1_60 = arith.constant 1 : index
    %c0_61 = arith.constant 0 : index
    %30 = vector.load %arg1[%c0_57, %c0_58, %c0_59, %c1_60, %c0_61] : memref<4x2x2x9x9xf32, #tpu.memory_space<vmem>>, vector<4x1x1x8x8xf32>
    %31 = vector.shape_cast %30 : vector<4x1x1x8x8xf32> to vector<4x8x8xf32>
    %c0_62 = arith.constant 0 : index
    %c2_63 = arith.constant 2 : index
    %c0_64 = arith.constant 0 : index
    %c0_65 = arith.constant 0 : index
    %c0_66 = arith.constant 0 : index
    %32 = vector.load %arg2[%c0_62, %c2_63, %c0_64, %c0_65, %c0_66] : memref<4x3x3x8x8xf32, #tpu.memory_space<vmem>>, vector<4x1x1x8x8xf32>
    %33 = vector.shape_cast %32 : vector<4x1x1x8x8xf32> to vector<4x8x8xf32>
    %34 = vector.shape_cast %31 : vector<4x8x8xf32> to vector<4x1x1x8x8xf32>
    tpu.vector_store %arg2[%c0_62, %c2_63, %c0_64, %c0_65, %c0_66], %34 {strides = array<i32>} : memref<4x3x3x8x8xf32, #tpu.memory_space<vmem>>, vector<4x1x1x8x8xf32>,
    %c0_67 = arith.constant 0 : index
    %c0_68 = arith.constant 0 : index
    %c1_69 = arith.constant 1 : index
    %c1_70 = arith.constant 1 : index
    %c0_71 = arith.constant 0 : index
    %35 = vector.load %arg1[%c0_67, %c0_68, %c1_69, %c1_70, %c0_71] : memref<4x2x2x9x9xf32, #tpu.memory_space<vmem>>, vector<4x1x1x8x8xf32>
    %36 = vector.shape_cast %35 : vector<4x1x1x8x8xf32> to vector<4x8x8xf32>
    %c0_72 = arith.constant 0 : index
    %c2_73 = arith.constant 2 : index
    %c1_74 = arith.constant 1 : index
    %c0_75 = arith.constant 0 : index
    %c0_76 = arith.constant 0 : index
    %37 = vector.load %arg2[%c0_72, %c2_73, %c1_74, %c0_75, %c0_76] : memref<4x3x3x8x8xf32, #tpu.memory_space<vmem>>, vector<4x1x1x8x8xf32>
    %38 = vector.shape_cast %37 : vector<4x1x1x8x8xf32> to vector<4x8x8xf32>
    %39 = vector.shape_cast %36 : vector<4x8x8xf32> to vector<4x1x1x8x8xf32>
    tpu.vector_store %arg2[%c0_72, %c2_73, %c1_74, %c0_75, %c0_76], %39 {strides = array<i32>} : memref<4x3x3x8x8xf32, #tpu.memory_space<vmem>>, vector<4x1x1x8x8xf32>,
    %c0_77 = arith.constant 0 : index
    %c0_78 = arith.constant 0 : index
    %c0_79 = arith.constant 0 : index
    %c1_80 = arith.constant 1 : index
    %c1_81 = arith.constant 1 : index
    %40 = vector.load %arg1[%c0_77, %c0_78, %c0_79, %c1_80, %c1_81] : memref<4x2x2x9x9xf32, #tpu.memory_space<vmem>>, vector<4x1x1x8x8xf32>
    %41 = vector.shape_cast %40 : vector<4x1x1x8x8xf32> to vector<4x8x8xf32>
    %c0_82 = arith.constant 0 : index
    %c2_83 = arith.constant 2 : index
    %c2_84 = arith.constant 2 : index
    %c0_85 = arith.constant 0 : index
    %c0_86 = arith.constant 0 : index
    %42 = vector.load %arg2[%c0_82, %c2_83, %c2_84, %c0_85, %c0_86] : memref<4x3x3x8x8xf32, #tpu.memory_space<vmem>>, vector<4x1x1x8x8xf32>
    %43 = vector.shape_cast %42 : vector<4x1x1x8x8xf32> to vector<4x8x8xf32>
    %44 = vector.shape_cast %41 : vector<4x8x8xf32> to vector<4x1x1x8x8xf32>
    tpu.vector_store %arg2[%c0_82, %c2_83, %c2_84, %c0_85, %c0_86], %44 {strides = array<i32>} : memref<4x3x3x8x8xf32, #tpu.memory_space<vmem>>, vector<4x1x1x8x8xf32>,
    return
  }
  func.func @transform_0(%arg0: i32) -> (i32, i32, i32, i32, i32) {
    %c0_i32 = arith.constant 0 : i32
    %c0_i32_0 = arith.constant 0 : i32
    %c0_i32_1 = arith.constant 0 : i32
    %c0_i32_2 = arith.constant 0 : i32
    %c0_i32_3 = arith.constant 0 : i32
    return %arg0, %c0_i32, %c0_i32_0, %c0_i32_1, %c0_i32_2 : i32, i32, i32, i32, i32
  }
  func.func @transform_1(%arg0: i32) -> (i32, i32, i32, i32, i32) {
    %c0_i32 = arith.constant 0 : i32
    %c0_i32_0 = arith.constant 0 : i32
    %c0_i32_1 = arith.constant 0 : i32
    %c0_i32_2 = arith.constant 0 : i32
    %c0_i32_3 = arith.constant 0 : i32
    return %arg0, %c0_i32, %c0_i32_0, %c0_i32_1, %c0_i32_2 : i32, i32, i32, i32, i32
  }
}

</mosaic_0001>

<llo_original>
// kernel: tpu_custom_call.1
$region0: #{tpu_custom_call.1}
  #allocation0 [shape = 'u32[]', space=smem, size = 0x4, offset = 0x4, fixed_abs, tag = 'smem constant byte address 0x4 - core index']
  #allocation1 [shape = 'u32[72,128]{1,0:T(1,128)}', space=vmem, size = 0x9000, scoped, tag = 'internal scratch']
  %s0 = inlined_call_operand.vmem [shape: f32[8,2,2,9,9], index: 0, kind: input, shape index: {}]
  %s1 = inlined_call_operand.hbm [shape: f32[8,3,3,8,8], index: 1, kind: output, shape index: {}]
  %s2 = sld [smem:[#allocation0]]
  $region37: #{tpu_custom_call.1} parent=0
    _
  %s4 = ssub.s32 1, %s2
  %s5 = scalar_select 0, %s4, %s2
  $region1: #{tpu_custom_call.1} parent=0
    #allocation2 [shape = 'u8[294912]{0}', space=vmem, size = 0x48000, scoped, tag = 'output window, operand 0']
    #allocation3 [shape = 's32[2]{0}', space=sflag, size = 0x8, scoped, tag = 'scoped memory for tpu_custom_call.1']
    %6 = vsyncpa [#allocation3], 0
    %s7 = scalar_lea.sflag [#allocation3], 1
    %8 = vsyncpa %s7, 0
    loop: start=0, step=1, limit=4
    $region2: #{tpu_custom_call.1} parent=1 // loop_pre_header
      _
    $region3: #{tpu_custom_call.1} parent=1 // loop_header
      %s10 = sphi 0, %s14
      %p11 = scmp.ge.s32.totalorder %s10, 4
      %s20 = sphi 0, %s22
      %s23 = sphi 0, %s20
      %s24 = sphi 0, %s23
      %s40 = sphi 0, %s24
      %s46 = sphi 0, %s48
      %s49 = sphi 0, %s46
      %s50 = sphi 0, %s49
      %s66 = sphi 0, %s50
    $region4: #{tpu_custom_call.1} parent=1 // loop_header_branch
      %13 = sbr.rel (%p11) target = $region8
    $region5: #{tpu_custom_call.1} parent=1 // loop_body
      %s15 = ssub.s32 %s10, 1
      %s16 = ssub.s32 %s10, 2
      %s17 = sadd.s32 %s10, 1
      %s18 = ssub.s32 %s10, %s17
      %p19 = scmp.eq.s32.totalorder %s18, 0
      %s21 = sadd.s32 %s20, 1
      %s22 = scalar_select %p19, %s20, %s21
      %p25 = pneg %p19
      %p26 = scmp.eq.s32.totalorder %s10, 1
      %p27 = por %p25, %p26
      %p28 = scmp.ne.s32.totalorder %s20, %s23
      %p29 = scmp.eq.s32.totalorder %s10, 0
      %p30 = por %p28, %p29
      %p31 = scmp.ne.s32.totalorder %s20, %s23
      %p32 = scmp.eq.s32.totalorder %s15, 1
      %p33 = por %p31, %p32
      %p34 = scmp.ne.s32.totalorder %s23, %s24
      %p35 = scmp.eq.s32.totalorder %s15, 0
      %p36 = por %p34, %p35
      %p37 = scmp.ne.s32.totalorder %s23, %s24
      %p38 = scmp.eq.s32.totalorder %s16, 1
      %p39 = por %p37, %p38
      %p41 = scmp.ne.s32.totalorder %s24, %s40
      %p42 = scmp.eq.s32.totalorder %s16, 0
      %p43 = por %p41, %p42
      %s44 = ssub.s32 %s10, %s17
      %p45 = scmp.eq.s32.totalorder %s44, 0
      %s47 = sadd.s32 %s46, 1
      %s48 = scalar_select %p45, %s46, %s47
      %p51 = pneg %p45
      %p52 = scmp.eq.s32.totalorder %s10, 1
      %p53 = por %p51, %p52
      %p54 = scmp.ne.s32.totalorder %s46, %s49
      %p55 = scmp.eq.s32.totalorder %s10, 0
      %p56 = por %p54, %p55
      %p57 = scmp.ne.s32.totalorder %s46, %s49
      %p58 = scmp.eq.s32.totalorder %s15, 1
      %p59 = por %p57, %p58
      %p60 = scmp.ne.s32.totalorder %s49, %s50
      %p61 = scmp.eq.s32.totalorder %s15, 0
      %p62 = por %p60, %p61
      %p63 = scmp.ne.s32.totalorder %s49, %s50
      %p64 = scmp.eq.s32.totalorder %s16, 1
      %p65 = por %p63, %p64
      %p67 = scmp.ne.s32.totalorder %s50, %s66
      %p68 = scmp.eq.s32.totalorder %s16, 0
      %p69 = por %p67, %p68
      %p70 = scmp.le.s32.totalorder 1, %s10
      %p71 = scmp.lt.s32.totalorder %s10, 3
      %p72 = pnand %p70, %p71
      %p73 = pneg %p72
      // Predicated region
      $region9: #{tpu_custom_call.1} parent=5 // pred_check
        _
      $region10: #{tpu_custom_call.1} parent=5 // pred_check_branch
        %75 = sbr.rel (%p72) target = $region12
      $region11: #{tpu_custom_call.1} parent=5 // pred_region
        %s76 = ssub.s32 %s10, 1
      $region12: #{tpu_custom_call.1} parent=5 // pred_fallthru
        _
      %p77 = scmp.lt.s32.totalorder %s10, 2
      // Predicated region
      $region13: #{tpu_custom_call.1} parent=5 // pred_check
        %p78 = pneg %p77
      $region14: #{tpu_custom_call.1} parent=5 // pred_check_branch
        %80 = sbr.rel (%p78) target = $region16
      $region15: #{tpu_custom_call.1} parent=5 // pred_region
        // Predicated region
        $region17: #{tpu_custom_call.1} parent=15 // pred_check
          %p81 = pneg %p30
        $region18: #{tpu_custom_call.1} parent=15 // pred_check_branch
          %83 = sbr.rel (%p81) target = $region20
        $region19: #{tpu_custom_call.1} parent=15 // pred_region
          %s84 = smul.u32 4, %s10
          %p85 = scmp.lt.s32.totalorder %s84, 7
          %s86 = scalar_select %p85, %s84, 7
          %s87 = smul.addr %s86, 8
          %s88 = smul.addr %s87, 8
          %s89 = scalar_lea.vmem %s0, %s88
          %s90 = smul.u32 4, %s10
        $region20: #{tpu_custom_call.1} parent=15 // pred_fallthru
          _
      $region16: #{tpu_custom_call.1} parent=5 // pred_fallthru
        _
      %p91 = scmp.le.s32.totalorder 1, %s10
      %p92 = scmp.lt.s32.totalorder %s10, 3
      %p93 = pnand %p91, %p92
      %p94 = pneg %p93
      // Predicated region
      $region21: #{tpu_custom_call.1} parent=5 // pred_check
        _
      $region22: #{tpu_custom_call.1} parent=5 // pred_check_branch
        %96 = sbr.rel (%p93) target = $region24
      $region23: #{tpu_custom_call.1} parent=5 // pred_region
        %s97 = ssub.s32 %s10, 1
        %s98 = smul.u32 4, %s15
        %p99 = scmp.lt.s32.totalorder %s98, 7
        %s100 = scalar_select %p99, %s98, 7
        %s101 = smul.addr %s100, 8
        %s102 = smul.addr %s101, 8
        %s103 = scalar_lea.vmem %s0, %s102
        %p104 = pneg %p36
        %p105 = pneg %p33
        %p106 = pneg %p62
        %p107 = pneg %p59
        %s108 = sand.u32 %s49, 1
        %s109 = scalar_lea.sflag [#allocation3], %s108
        %s110 = sand.u32 %s49, 1
        %s111 = smul.addr %s110, 288
        %s112 = scalar_lea.vmem [#allocation2], %s111
        %s113 = smul.u32 4, %s15
        %p114 = scmp.lt.s32.totalorder %s113, 7
        %s115 = scalar_select %p114, %s113, 7
        %s116 = smul.addr %s115, 8
        %s117 = smul.addr %s116, 8
        %s118 = scalar_lea.vmem %s0, %s117
        %s119 = smul.u32 4, %s15
        %s120 = smul.u32 4, %s15
        %v121 = vld [vmem:[%s118] sm:$0xff]
        %v122 = vld [vmem:[%s118 + $0x40] sm:$0xff]
        %v123 = vld [vmem:[%s118 + $0x80] sm:$0xff]
        %v124 = vld [vmem:[%s118 + $0xc0] sm:$0xff]
        %vm125 = vcmask 64512
        %126 = vst.msk [vmem:[%s112] sm:$0xff] %vm125, %v121
        %127 = vst.msk [vmem:[%s112 + $0x48] sm:$0xff] %vm125, %v122
        %128 = vst.msk [vmem:[%s112 + $0x90] sm:$0xff] %vm125, %v123
        %129 = vst.msk [vmem:[%s112 + $0xd8] sm:$0xff] %vm125, %v124
        %s130 = scalar_lea.vmem %s118, 16
        %v131 = vld [vmem:[%s130] sm:$0xff]
        %v132 = vld [vmem:[%s130 + $0x40] sm:$0xff]
        %v133 = vld [vmem:[%s130 + $0x80] sm:$0xff]
        %v134 = vld [vmem:[%s130 + $0xc0] sm:$0xff]
        %s135 = scalar_lea.vmem %s112, 8 [#allocation2]
        %136 = vst.msk [vmem:[%s135] sm:$0xff] %vm125, %v131
        %137 = vst.msk [vmem:[%s135 + $0x48] sm:$0xff] %vm125, %v132
        %138 = vst.msk [vmem:[%s135 + $0x90] sm:$0xff] %vm125, %v133
        %139 = vst.msk [vmem:[%s135 + $0xd8] sm:$0xff] %vm125, %v134
        %v140 = vld [vmem:[%s118] sm:$0xff]
        %v141 = vld [vmem:[%s118 + $0x40] sm:$0xff]
        %v142 = vld [vmem:[%s118 + $0x80] sm:$0xff]
        %v143 = vld [vmem:[%s118 + $0xc0] sm:$0xff]
        %148 = vrot.lane.b32.xlu0 %v140, 127
        %v149 = vpop.permute.xlu0 %148
        %150 = vrot.lane.b32.xlu0 %v141, 127
        %v151 = vpop.permute.xlu0 %150
        %152 = vrot.lane.b32.xlu0 %v142, 127
        %v153 = vpop.permute.xlu0 %152
        %154 = vrot.lane.b32.xlu0 %v143, 127
        %v155 = vpop.permute.xlu0 %154
        %s160 = scalar_lea.vmem %s112, 16 [#allocation2]
        %161 = vst.msk [vmem:[%s160] sm:$0xff] %vm125, %v149
        %162 = vst.msk [vmem:[%s160 + $0x48] sm:$0xff] %vm125, %v151
        %163 = vst.msk [vmem:[%s160 + $0x90] sm:$0xff] %vm125, %v153
        %164 = vst.msk [vmem:[%s160 + $0xd8] sm:$0xff] %vm125, %v155
        %s165 = scalar_lea.vmem %s118, 32
        %v166 = vld [vmem:[%s165] sm:$0xff]
        %v167 = vld [vmem:[%s165 + $0x40] sm:$0xff]
        %v168 = vld [vmem:[%s165 + $0x80] sm:$0xff]
        %v169 = vld [vmem:[%s165 + $0xc0] sm:$0xff]
        %s170 = scalar_lea.vmem %s112, 24 [#allocation2]
        %171 = vst.msk [vmem:[%s170] sm:$0xff] %vm125, %v166
        %172 = vst.msk [vmem:[%s170 + $0x48] sm:$0xff] %vm125, %v167
        %173 = vst.msk [vmem:[%s170 + $0x90] sm:$0xff] %vm125, %v168
        %174 = vst.msk [vmem:[%s170 + $0xd8] sm:$0xff] %vm125, %v169
        %s175 = scalar_lea.vmem %s118, 48
        %v176 = vld [vmem:[%s175] sm:$0xff]
        %v177 = vld [vmem:[%s175 + $0x40] sm:$0xff]
        %v178 = vld [vmem:[%s175 + $0x80] sm:$0xff]
        %v179 = vld [vmem:[%s175 + $0xc0] sm:$0xff]
        %s180 = scalar_lea.vmem %s112, 32 [#allocation2]
        %181 = vst.msk [vmem:[%s180] sm:$0xff] %vm125, %v176
        %182 = vst.msk [vmem:[%s180 + $0x48] sm:$0xff] %vm125, %v177
        %183 = vst.msk [vmem:[%s180 + $0x90] sm:$0xff] %vm125, %v178
        %184 = vst.msk [vmem:[%s180 + $0xd8] sm:$0xff] %vm125, %v179
        %v185 = vld [vmem:[%s165] sm:$0xff]
        %v186 = vld [vmem:[%s165 + $0x40] sm:$0xff]
        %v187 = vld [vmem:[%s165 + $0x80] sm:$0xff]
        %v188 = vld [vmem:[%s165 + $0xc0] sm:$0xff]
        %193 = vrot.lane.b32.xlu0 %v185, 127
        %v194 = vpop.permute.xlu0 %193
        %195 = vrot.lane.b32.xlu0 %v186, 127
        %v196 = vpop.permute.xlu0 %195
        %197 = vrot.lane.b32.xlu0 %v187, 127
        %v198 = vpop.permute.xlu0 %197
        %199 = vrot.lane.b32.xlu0 %v188, 127
        %v200 = vpop.permute.xlu0 %199
        %s205 = scalar_lea.vmem %s112, 40 [#allocation2]
        %206 = vst.msk [vmem:[%s205] sm:$0xff] %vm125, %v194
        %207 = vst.msk [vmem:[%s205 + $0x48] sm:$0xff] %vm125, %v196
        %208 = vst.msk [vmem:[%s205 + $0x90] sm:$0xff] %vm125, %v198
        %209 = vst.msk [vmem:[%s205 + $0xd8] sm:$0xff] %vm125, %v200
        %v210 = vld [vmem:[%s118 + $0x1] sm:$0xff]
        %v211 = vld [vmem:[%s118 + $0x41] sm:$0xff]
        %v212 = vld [vmem:[%s118 + $0x81] sm:$0xff]
        %v213 = vld [vmem:[%s118 + $0xc1] sm:$0xff]
        %s214 = scalar_lea.vmem %s112, 48 [#allocation2]
        %215 = vst.msk [vmem:[%s214] sm:$0xff] %vm125, %v210
        %216 = vst.msk [vmem:[%s214 + $0x48] sm:$0xff] %vm125, %v211
        %217 = vst.msk [vmem:[%s214 + $0x90] sm:$0xff] %vm125, %v212
        %218 = vst.msk [vmem:[%s214 + $0xd8] sm:$0xff] %vm125, %v213
        %v219 = vld [vmem:[%s130 + $0x1] sm:$0xff]
        %v220 = vld [vmem:[%s130 + $0x41] sm:$0xff]
        %v221 = vld [vmem:[%s130 + $0x81] sm:$0xff]
        %v222 = vld [vmem:[%s130 + $0xc1] sm:$0xff]
        %s223 = scalar_lea.vmem %s112, 56 [#allocation2]
        %224 = vst.msk [vmem:[%s223] sm:$0xff] %vm125, %v219
        %225 = vst.msk [vmem:[%s223 + $0x48] sm:$0xff] %vm125, %v220
        %226 = vst.msk [vmem:[%s223 + $0x90] sm:$0xff] %vm125, %v221
        %227 = vst.msk [vmem:[%s223 + $0xd8] sm:$0xff] %vm125, %v222
        %v228 = vld [vmem:[%s118 + $0x1] sm:$0xff]
        %v229 = vld [vmem:[%s118 + $0x41] sm:$0xff]
        %v230 = vld [vmem:[%s118 + $0x81] sm:$0xff]
        %v231 = vld [vmem:[%s118 + $0xc1] sm:$0xff]
        %236 = vrot.lane.b32.xlu0 %v228, 127
        %v237 = vpop.permute.xlu0 %236
        %238 = vrot.lane.b32.xlu0 %v229, 127
        %v239 = vpop.permute.xlu0 %238
        %240 = vrot.lane.b32.xlu0 %v230, 127
        %v241 = vpop.permute.xlu0 %240
        %242 = vrot.lane.b32.xlu0 %v231, 127
        %v243 = vpop.permute.xlu0 %242
        %s248 = scalar_lea.vmem %s112, 64 [#allocation2]
        %249 = vst.msk [vmem:[%s248] sm:$0xff] %vm125, %v237
        %250 = vst.msk [vmem:[%s248 + $0x48] sm:$0xff] %vm125, %v239
        %251 = vst.msk [vmem:[%s248 + $0x90] sm:$0xff] %vm125, %v241
        %252 = vst.msk [vmem:[%s248 + $0xd8] sm:$0xff] %vm125, %v243
        %s253 = sand.u32 %s49, 1
        %s254 = scalar_lea.sflag [#allocation3], %s253
        %s255 = sand.u32 %s49, 1
        %s256 = smul.addr %s255, 288
        %s257 = scalar_lea.vmem [#allocation2], %s256
        // Predicated region
        $region25: #{tpu_custom_call.1} parent=23 // pred_check
          %p258 = pneg %p59
        $region26: #{tpu_custom_call.1} parent=23 // pred_check_branch
          %260 = sbr.rel (%p258) target = $region28
        $region27: #{tpu_custom_call.1} parent=23 // pred_region
          %s261 = smul.u32 4, %s15
          %263 = vsyncadd %s254, 0
          %s264 = smul.addr %s261, 9
          %s265 = smul.addr %s264, 8
          %s266 = scalar_lea.hbm %s1, %s265
          %s267 = sshll.u32 %s257, 4
          %s268 = int_to_ptr.vmem [resolvable:$true] %s267
          %s269 = sshll.u32 %s266, 4
          %s270 = int_to_ptr.hbm [resolvable:$true] %s269
          %275 = dma.vmem_to_hbm [thread:$0]  %s268, 4608, %s270, %s254, 128, 128, 8
        $region28: #{tpu_custom_call.1} parent=23 // pred_fallthru
          _
      $region24: #{tpu_custom_call.1} parent=5 // pred_fallthru
        _
      %p276 = scmp.le.s32.totalorder 2, %s10
      // Predicated region
      $region29: #{tpu_custom_call.1} parent=5 // pred_check
        %p277 = pneg %p276
      $region30: #{tpu_custom_call.1} parent=5 // pred_check_branch
        %279 = sbr.rel (%p277) target = $region32
      $region31: #{tpu_custom_call.1} parent=5 // pred_region
        %s280 = ssub.s32 %s10, 2
        // Predicated region
        $region33: #{tpu_custom_call.1} parent=31 // pred_check
          %p281 = pneg %p65
        $region34: #{tpu_custom_call.1} parent=31 // pred_check_branch
          %283 = sbr.rel (%p281) target = $region36
        $region35: #{tpu_custom_call.1} parent=31 // pred_region
          %s284 = sand.u32 %s50, 1
          %s285 = scalar_lea.sflag [#allocation3], %s284
          %s286 = sand.u32 %s50, 1
          %s287 = smul.addr %s286, 288
          %s288 = scalar_lea.vmem [#allocation2], %s287
          %290 = dma.done %s285, 4608
        $region36: #{tpu_custom_call.1} parent=31 // pred_fallthru
          _
      $region32: #{tpu_custom_call.1} parent=5 // pred_fallthru
        _
    $region6: #{tpu_custom_call.1} parent=1 // loop_footer
      %s14 = sadd.s32 1, %s10
    $region7: #{tpu_custom_call.1} parent=1 // loop_footer_branch
      %9 = sbr.rel target = $region3
    $region8: #{tpu_custom_call.1} parent=1 // loop_exit
      _
    %291 = vsyncpa [#allocation3], 1
    %s292 = scalar_lea.sflag [#allocation3], 1
    %293 = vsyncpa %s292, 1

</llo_original>
